<compile_context>
chip_gen: v6e
topology: v6e:2x2x1
jax: 0.10.0
libtpu: 0.0.40
codegen_flags: <defaults>
</compile_context>

<pallas_src>
import jax
import jax.numpy as jnp
from jax.experimental import pallas as pl
from jax.experimental.pallas import tpu as pltpu


_TARGET_TILE_BYTES = 8 << 20    # 8 MiB per x tile; double-buffered in+out = 32 MiB
_VMEM_LIMIT_BYTES = 48 << 20    # explicit scoped-VMEM limit, safe on v5e/v6e/v7x
_MEGACORE_MIN_BYTES = 1 << 20   # split rows for 2 TCs only above this array size


def _round_up(x, m):
    return ((x + m - 1) // m) * m


def _choose_tiles(R, S, itemsize):
    """Pick (tr, ts): prefer full-width (contiguous) rows; split the lane axis
    only when even a minimal 8-row full-width tile would blow the budget."""
    row_bytes = S * itemsize
    if min(R, 8) * row_bytes <= _TARGET_TILE_BYTES:
        ts = S                                            # contiguous HBM slabs
        tr_cap = max(_TARGET_TILE_BYTES // row_bytes, 1)
        tr = min(R, tr_cap)
        if tr == R:
            # Whole array fits in one tile; still split the row axis in two
            # (for non-trivial sizes) so v7x's two TensorCores can each take
            # a "parallel" grid block.
            if R >= 16 and R * row_bytes >= _MEGACORE_MIN_BYTES:
                tr = _round_up(pl.cdiv(R, 2), 8)
        else:
            tr = max((tr // 8) * 8, 8)                    # (8,·)-aligned, <= cap
    else:
        # Rare: single rows are huge -> split lanes (strided DMA unavoidable).
        tr = R if R < 8 else 8
        ts_cap = _TARGET_TILE_BYTES // (tr * itemsize)
        ts = min(S, max((ts_cap // 128) * 128, 128))
    return tr, ts


def _filtered_kernel(x_ref, f_ref, o_ref):
    # output(hidden(x)) = (x * filter_x) * filter_input == x * fused_filter
    o_ref[...] = x_ref[...] * f_ref[...]                  # (tr, ts) * (tr, 1)


def filtered_module_forward(x, filter_x, filter_input, *, donate_x=False):
    """x: (B, C, H, W); filter_x, filter_input: (C,) per-channel filters."""
    B, C, H, W = x.shape
    R = B * C          # rows  = (batch, channel) pairs
    S = H * W          # lanes = flattened spatial

    # Wrapper-side glue ((C,)-sized, negligible): fuse the two per-channel
    # filters in f32 (limits double-rounding) and expand to one scale per row.
    fused = (filter_x.astype(jnp.float32) *
             filter_input.astype(jnp.float32)).astype(x.dtype)     # (C,)
    f_row = jnp.tile(fused, (B,)).reshape(R, 1)                    # (R, 1)

    x2d = x.reshape(R, S)
    itemsize = jnp.dtype(x.dtype).itemsize
    tr, ts = _choose_tiles(R, S, itemsize)
    grid = (pl.cdiv(R, tr), pl.cdiv(S, ts))

    out2d = pl.pallas_call(
        _filtered_kernel,
        out_shape=jax.ShapeDtypeStruct((R, S), x.dtype),
        grid=grid,
        in_specs=[
            pl.BlockSpec((tr, ts), lambda i, j: (i, j)),   # x tile (full rows)
            pl.BlockSpec((tr, 1), lambda i, j: (i, 0)),    # fused filter column
        ],
        out_specs=pl.BlockSpec((tr, ts), lambda i, j: (i, j)),
        compiler_params=pltpu.CompilerParams(
            dimension_semantics=("parallel", "parallel"),
            vmem_limit_bytes=_VMEM_LIMIT_BYTES),
        cost_estimate=pl.CostEstimate(
            flops=R * S,
            transcendentals=0,
            bytes_accessed=2 * R * S * itemsize + R * itemsize),
        input_output_aliases=({0: 0} if donate_x else {}),
    )(x2d, f_row)

    return out2d.reshape(B, C, H, W)


if __name__ == "__main__":
    key = jax.random.PRNGKey(0)
    kx, kf1, kf2, kx2 = jax.random.split(key, 4)

    # 1) Small NCHW shape consistent with the module's conv-style activations.
    B, C, H, W = 2, 4, 16, 16
    x = jax.random.normal(kx, (B, C, H, W), dtype=jnp.float32)
    filter_x = (jax.random.uniform(kf1, (C,), dtype=jnp.float32) > 0.5
                ).astype(jnp.float32)
    filter_input = jax.random.uniform(kf2, (C,), dtype=jnp.float32)

    out = jax.block_until_ready(
        filtered_module_forward(x, filter_x, filter_input))
    ref = x * filter_x.reshape(1, C, 1, 1) * filter_input.reshape(1, C, 1, 1)
    assert out.shape == (B, C, H, W)
    assert jnp.allclose(out, ref, rtol=1e-5, atol=1e-6), "mismatch vs reference"

    # 2) Larger shape exercising the multi-block "parallel" row split
    #    (grid (2, 1)) and the donate_x / input_output_aliases path.
    B2, C2, H2, W2 = 8, 16, 64, 64          # R=128, S=4096 -> tr=64, grid (2, 1)
    x2 = jax.random.normal(kx2, (B2, C2, H2, W2), dtype=jnp.float32)
    fx2 = jnp.linspace(0.0, 1.0, C2, dtype=jnp.float32)
    fi2 = jnp.linspace(1.0, 0.5, C2, dtype=jnp.float32)
    ref2 = x2 * fx2.reshape(1, C2, 1, 1) * fi2.reshape(1, C2, 1, 1)
    out2 = jax.block_until_ready(
        filtered_module_forward(x2, fx2, fi2, donate_x=True))
    assert jnp.allclose(out2, ref2, rtol=1e-5, atol=1e-6), "mismatch (tiled)"

    # 3) bf16 path (bandwidth-bound: halved bytes/elem when the model is bf16).
    xb = x.astype(jnp.bfloat16)
    outb = jax.block_until_ready(
        filtered_module_forward(xb, filter_x, filter_input))
    refb = (xb.astype(jnp.float32)
            * filter_x.reshape(1, C, 1, 1) * filter_input.reshape(1, C, 1, 1))
    assert jnp.allclose(outb.astype(jnp.float32), refb, rtol=2e-2, atol=2e-2), \
        "mismatch (bf16)"

    print("KERNEL_OK")
</pallas_src>

<mosaic_0001>
module attributes {stable_mosaic.version = 11 : i64} {
  func.func @_filtered_kernel(%arg0: i32, %arg1: i32, %arg2: memref<8x256xf32, #tpu.memory_space<vmem>>, %arg3: memref<8x1xf32, #tpu.memory_space<vmem>>, %arg4: memref<8x256xf32, #tpu.memory_space<vmem>>) attributes {dimension_semantics = [#tpu.dimension_semantics<parallel>, #tpu.dimension_semantics<parallel>], iteration_bounds = array<i64: 1, 1>, scalar_prefetch = 0 : i64, scratch_operands = 0 : i64, tpu.core_type = #tpu.core_type<tc>, window_params = [{transform_indices = @transform_0, window_bounds = array<i64: 8, 256>}, {transform_indices = @transform_1, window_bounds = array<i64: 8, 1>}, {transform_indices = @transform_2, window_bounds = array<i64: 8, 256>}]} {
    %c0 = arith.constant 0 : index
    %c0_0 = arith.constant 0 : index
    %0 = vector.load %arg2[%c0, %c0_0] : memref<8x256xf32, #tpu.memory_space<vmem>>, vector<8x256xf32>
    %c0_1 = arith.constant 0 : index
    %c0_2 = arith.constant 0 : index
    %1 = vector.load %arg3[%c0_1, %c0_2] : memref<8x1xf32, #tpu.memory_space<vmem>>, vector<8x1xf32>
    %2 = vector.broadcast %1 : vector<8x1xf32> to vector<8x256xf32>
    %3 = arith.mulf %0, %2 : vector<8x256xf32>
    %c0_3 = arith.constant 0 : index
    %c0_4 = arith.constant 0 : index
    %4 = vector.load %arg4[%c0_3, %c0_4] : memref<8x256xf32, #tpu.memory_space<vmem>>, vector<8x256xf32>
    tpu.vector_store %arg4[%c0_3, %c0_4], %3 {strides = array<i32>} : memref<8x256xf32, #tpu.memory_space<vmem>>, vector<8x256xf32>,
    return
  }
  func.func @transform_0(%arg0: i32, %arg1: i32) -> (i32, i32) {
    %c0_i32 = arith.constant 0 : i32
    return %arg0, %arg1 : i32, i32
  }
  func.func @transform_1(%arg0: i32, %arg1: i32) -> (i32, i32) {
    %c0_i32 = arith.constant 0 : i32
    %c0_i32_0 = arith.constant 0 : i32
    return %arg0, %c0_i32 : i32, i32
  }
  func.func @transform_2(%arg0: i32, %arg1: i32) -> (i32, i32) {
    %c0_i32 = arith.constant 0 : i32
    return %arg0, %arg1 : i32, i32
  }
}

</mosaic_0001>

<llo_original>
// kernel: tpu_custom_call.1
$region0: #{tpu_custom_call.1}
  #allocation0 [shape = 'u32[]', space=smem, size = 0x4, offset = 0x4, fixed_abs, tag = 'smem constant byte address 0x4 - core index']
  #allocation1 [shape = 'u32[144,128]{1,0:T(1,128)}', space=vmem, size = 0x12000, scoped, tag = 'internal scratch']
  %s0 = inlined_call_operand.hbm [shape: f32[8,256], index: 0, kind: input, shape index: {}]
  %s1 = inlined_call_operand.vmem [shape: f32[8,1], index: 1, kind: input, shape index: {}]
  %s2 = inlined_call_operand.hbm [shape: f32[8,256], index: 2, kind: output, shape index: {}]
  %s3 = sld [smem:[#allocation0]]
  $region22: #{tpu_custom_call.1} parent=0
    _
  %s5 = ssub.s32 1, %s3
  %s6 = scalar_select 0, %s5, %s3
  $region1: #{tpu_custom_call.1} parent=0
    #allocation2 [shape = 'u8[8192]{0}', space=vmem, size = 0x2000, scoped, tag = 'input window, operand 0, single buffered']
    #allocation3 [shape = 's32[1]{0}', space=sflag, size = 0x4, scoped, tag = 'scoped memory for tpu_custom_call.1']
    #allocation4 [shape = 's32[1]{0}', space=sflag, size = 0x4, scoped, tag = 'scoped memory for tpu_custom_call.1']
    #allocation5 [shape = 'u8[8192]{0}', space=vmem, size = 0x2000, scoped, tag = 'output window, operand 0, single buffered']
    %7 = vsyncpa [#allocation3], 0
    %8 = vsyncpa [#allocation4], 0
    // Predicated region
    $region2: #{tpu_custom_call.1} parent=1 // pred_check
      _
    $region3: #{tpu_custom_call.1} parent=1 // pred_check_branch
      %10 = sbr.rel (0) target = $region5
    $region4: #{tpu_custom_call.1} parent=1 // pred_region
      %s12 = ssub.s32 256, 256
      %13 = vsyncadd [#allocation3], %s12
      %s15 = sshll.u32 [#allocation2], 4
      %s16 = int_to_ptr.vmem [resolvable:$true] %s15
      %18 = dma.hbm_to_vmem [thread:$0]  %s0, 256, %s16, [#allocation3]
    $region5: #{tpu_custom_call.1} parent=1 // pred_fallthru
      _
    // Predicated region
    $region6: #{tpu_custom_call.1} parent=1 // pred_check
      _
    $region7: #{tpu_custom_call.1} parent=1 // pred_check_branch
      %20 = sbr.rel (0) target = $region9
    $region8: #{tpu_custom_call.1} parent=1 // pred_region
      _
    $region9: #{tpu_custom_call.1} parent=1 // pred_fallthru
      _
    // Predicated region
    $region10: #{tpu_custom_call.1} parent=1 // pred_check
      _
    $region11: #{tpu_custom_call.1} parent=1 // pred_check_branch
      %22 = sbr.rel (0) target = $region13
    $region12: #{tpu_custom_call.1} parent=1 // pred_region
      %23 = dma.done [#allocation3], 256
    $region13: #{tpu_custom_call.1} parent=1 // pred_fallthru
      _
    %v24 = vld [vmem:[#allocation2] sm:$0xff]
    %v25 = vld [vmem:[#allocation2 + $0x8] sm:$0xff]
    %v26 = vld [vmem:[%s1] sm:$0xff]
    %28 = vset.pattern.permute.xlu0 0
    %29 = vperm.xlu0 %28, %v26
    %v30 = vpop.permute.xlu0 %29
    %v32 = vmul.f32 %v24, %v30
    %v33 = vmul.f32 %v25, %v30
    %34 = vst [vmem:[#allocation5] sm:$0xff] %v32
    %35 = vst [vmem:[#allocation5 + $0x8] sm:$0xff] %v33
    // Predicated region
    $region14: #{tpu_custom_call.1} parent=1 // pred_check
      _
    $region15: #{tpu_custom_call.1} parent=1 // pred_check_branch
      %37 = sbr.rel (0) target = $region17
    $region16: #{tpu_custom_call.1} parent=1 // pred_region
      %s39 = ssub.s32 256, 256
      %40 = vsyncadd [#allocation4], %s39
      %s42 = sshll.u32 [#allocation5], 4
      %s43 = int_to_ptr.vmem [resolvable:$true] %s42
      %45 = dma.vmem_to_hbm [thread:$0]  %s43, 256, %s2, [#allocation4]
    $region17: #{tpu_custom_call.1} parent=1 // pred_fallthru
      _
    // Predicated region
    $region18: #{tpu_custom_call.1} parent=1 // pred_check
      _
    $region19: #{tpu_custom_call.1} parent=1 // pred_check_branch
      %47 = sbr.rel (0) target = $region21
    $region20: #{tpu_custom_call.1} parent=1 // pred_region
      %48 = dma.done [#allocation4], 256
    $region21: #{tpu_custom_call.1} parent=1 // pred_fallthru
      _
    %49 = vsyncpa [#allocation3], 1
    %50 = vsyncpa [#allocation4], 1

</llo_original>
